<compile_context>
chip_gen: v7x
topology: tpu7x:2x2x1
jax: 0.10.0
libtpu: 0.0.40
codegen_flags: <defaults>
</compile_context>

<pallas_src>
import functools
import math

import jax
import jax.numpy as jnp
from jax.experimental import pallas as pl
from jax.experimental.pallas import tpu as pltpu


def _round_up(x, m):
    return ((x + m - 1) // m) * m


def _actor_kernel(x_ref, w1_ref, b1_ref, w2_ref, b2_ref,
                  w3_ref, b3_ref, w4_ref, b4_ref, out_ref,
                  *, action_lim, action_dim):
    # Weights arrive pre-cast to bf16; activations are cast to bf16 only at
    # each MXU input, with f32 accumulation and f32 elementwise math.
    x = x_ref[...].astype(jnp.bfloat16)

    # fc1 + relu
    h = jnp.dot(x, w1_ref[...], preferred_element_type=jnp.float32)
    h = jnp.maximum(h + b1_ref[...], 0.0)
    # fc2 + relu
    h = jnp.dot(h.astype(jnp.bfloat16), w2_ref[...],
                preferred_element_type=jnp.float32)
    h = jnp.maximum(h + b2_ref[...], 0.0)
    # fc3 + relu (output lane-padded 64 -> 128; padded lanes are exactly 0)
    h = jnp.dot(h.astype(jnp.bfloat16), w3_ref[...],
                preferred_element_type=jnp.float32)
    h = jnp.maximum(h + b3_ref[...], 0.0)
    # fc4 (lane-padded to 128 for the MXU) + tanh, scaled to [-lim, lim]
    a = jnp.dot(h.astype(jnp.bfloat16), w4_ref[...],
                preferred_element_type=jnp.float32)
    a = jnp.tanh(a + b4_ref[...]) * action_lim
    # Store only the real action columns: a masked store on `action_dim`
    # lanes is trivial and avoids the 16x padded-f32 writeback + wrapper slice.
    out_ref[...] = a[:, :action_dim].astype(out_ref.dtype)


def prepare_actor_params(params):
    """One-time weight prep (bf16 casts + lane padding).

    Call once at parameter creation / checkpoint load, NOT on every forward
    step -- this is the per-call HBM-re-reading work hoisted out of
    actor_forward.
    """
    action_dim = params["w4"].shape[1]
    h3 = params["w3"].shape[1]                       # 64
    h3_pad = _round_up(max(h3, 128), 128)            # -> 128
    a_pad = _round_up(max(action_dim, 128), 128)     # -> 128

    w1 = params["w1"].astype(jnp.bfloat16)
    w2 = params["w2"].astype(jnp.bfloat16)

    # fc3: zero-pad output columns so h3 is lane-dense.  Bias pad is 0.0 so
    # the padded lanes stay exactly zero through ReLU.
    w3p = jnp.zeros((params["w3"].shape[0], h3_pad), jnp.bfloat16)
    w3p = w3p.at[:, :h3].set(params["w3"].astype(jnp.bfloat16))
    b3p = jnp.zeros((1, h3_pad), jnp.float32).at[:, :h3].set(params["b3"])

    # fc4: zero-pad input rows (matching h3's padding -> zero contribution)
    # and output columns to a lane-dense MXU tile.
    w4p = jnp.zeros((h3_pad, a_pad), jnp.bfloat16)
    w4p = w4p.at[:h3, :action_dim].set(params["w4"].astype(jnp.bfloat16))
    b4p = jnp.zeros((1, a_pad), jnp.float32).at[:, :action_dim].set(params["b4"])

    return {
        "w1": w1, "b1": params["b1"],
        "w2": w2, "b2": params["b2"],
        "w3": w3p, "b3": b3p,
        "w4": w4p, "b4": b4p,
    }


def actor_forward(state, prep, action_dim, action_lim, *, tile_n=4096):
    """state: [n, state_dim] f32; prep: output of prepare_actor_params.

    Returns [n, action_dim] float32 actions in [-action_lim, action_lim].
    """
    n, state_dim = state.shape
    w1, b1 = prep["w1"], prep["b1"]
    w2, b2 = prep["w2"], prep["b2"]
    w3, b3 = prep["w3"], prep["b3"]
    w4, b4 = prep["w4"], prep["b4"]
    a_pad = w4.shape[1]

    # Batch tile: as large as possible (amortizes ~0.35 us per grid step),
    # but capped so (a) large batches always produce >= 2 grid steps for v7x
    # 2-TC megacore sharding and (b) it never exceeds the (8-rounded) batch.
    tn = min(tile_n,
             max(256, _round_up(pl.cdiv(n, 2), 8)),
             _round_up(n, 8))
    grid = (pl.cdiv(n, tn),)

    dims = (state_dim, w1.shape[1], w2.shape[1], w3.shape[1], a_pad)
    flops = 2 * n * sum(dims[i] * dims[i + 1] for i in range(4))
    bytes_accessed = (
        state.size * 4 + n * action_dim * 4
        + sum(int(w.size) * 2 for w in (w1, w2, w3, w4))
        + sum(int(b.size) * 4 for b in (b1, b2, b3, b4)))
    cost = pl.CostEstimate(flops=flops,
                           transcendentals=n * a_pad,
                           bytes_accessed=bytes_accessed)

    kernel = functools.partial(_actor_kernel,
                               action_lim=float(action_lim),
                               action_dim=int(action_dim))

    def _const(i):
        return (0, 0)

    # NOTE: weights/biases have constant index maps, so they stay VMEM
    # resident across grid steps.  (pipeline_mode=pl.Buffered(1) would also
    # drop their unused second buffer; skipped as low-value per review since
    # VMEM is nowhere near tight.)
    out = pl.pallas_call(
        kernel,
        out_shape=jax.ShapeDtypeStruct((n, action_dim), jnp.float32),
        grid=grid,
        in_specs=[
            pl.BlockSpec((tn, state_dim), lambda i: (i, 0)),   # state tile
            pl.BlockSpec(w1.shape, _const),
            pl.BlockSpec(b1.shape, _const),
            pl.BlockSpec(w2.shape, _const),
            pl.BlockSpec(b2.shape, _const),
            pl.BlockSpec(w3.shape, _const),
            pl.BlockSpec(b3.shape, _const),
            pl.BlockSpec(w4.shape, _const),
            pl.BlockSpec(b4.shape, _const),
        ],
        out_specs=pl.BlockSpec((tn, action_dim), lambda i: (i, 0)),
        compiler_params=pltpu.CompilerParams(
            dimension_semantics=("parallel",),     # megacore-shardable on v7x
            vmem_limit_bytes=32 << 20),
        cost_estimate=cost,
    )(state, w1, b1, w2, b2, w3, b3, w4, b4)

    return out


def _xavier_uniform(key, fan_in, fan_out):
    # Matches nn.init.xavier_uniform_ (gain=1): U(-a, a), a = sqrt(6/(fan_in+fan_out))
    a = math.sqrt(6.0 / (fan_in + fan_out))
    # Stored as [fan_in, fan_out] (already transposed for x @ W).
    return jax.random.uniform(key, (fan_in, fan_out), jnp.float32, -a, a)


def init_actor_params(key, state_dim, action_dim):
    dims = [state_dim, 256, 128, 64, action_dim]
    keys = jax.random.split(key, 4)
    params = {}
    for i in range(4):
        fan_in, fan_out = dims[i], dims[i + 1]
        params[f"w{i+1}"] = _xavier_uniform(keys[i], fan_in, fan_out)
        # init_weights fills bias with 0.01
        params[f"b{i+1}"] = jnp.full((1, fan_out), 0.01, jnp.float32)
    return params


if __name__ == "__main__":
    key = jax.random.PRNGKey(0)
    k_param, k_state = jax.random.split(key)

    # NOTE: tiny batches (n=2) leave the MXU almost idle; in real use batch
    # many actor evaluations together before calling the kernel.
    batch = 2
    state_dim = 16
    action_dim = 8
    action_lim = 2.0

    params = init_actor_params(k_param, state_dim, action_dim)
    prep = prepare_actor_params(params)          # one-time cast + pad
    state = jax.random.normal(k_state, (batch, state_dim), jnp.float32)

    action = actor_forward(state, prep, action_dim, action_lim)
    action = jax.block_until_ready(action)
    assert action.shape == (batch, action_dim)

    # Reference with the same bf16-input / f32-accumulate matmul recipe
    # (padding in the kernel is mathematically transparent).
    h = state
    for i in range(1, 4):
        h = jnp.maximum(
            jnp.dot(h.astype(jnp.bfloat16), params[f"w{i}"].astype(jnp.bfloat16),
                    preferred_element_type=jnp.float32) + params[f"b{i}"], 0.0)
    ref_bf16 = jnp.tanh(
        jnp.dot(h.astype(jnp.bfloat16), params["w4"].astype(jnp.bfloat16),
                preferred_element_type=jnp.float32) + params["b4"]) * action_lim
    assert jnp.allclose(action, ref_bf16, atol=1e-3, rtol=1e-3)

    # Sanity check against a full-f32 reference (looser tol: bf16 MXU inputs).
    h = state
    for i in range(1, 4):
        h = jnp.maximum(h @ params[f"w{i}"] + params[f"b{i}"], 0.0)
    ref_f32 = jnp.tanh(h @ params["w4"] + params["b4"]) * action_lim
    assert jnp.allclose(action, ref_f32, atol=5e-2, rtol=5e-2)

    print("KERNEL_OK")
</pallas_src>

<mosaic_0001>
module attributes {stable_mosaic.version = 11 : i64} {
  func.func @_actor_kernel(%arg0: i32, %arg1: memref<8x16xf32, #tpu.memory_space<vmem>>, %arg2: memref<16x256xbf16, #tpu.memory_space<vmem>>, %arg3: memref<1x256xf32, #tpu.memory_space<vmem>>, %arg4: memref<256x128xbf16, #tpu.memory_space<vmem>>, %arg5: memref<1x128xf32, #tpu.memory_space<vmem>>, %arg6: memref<128x128xbf16, #tpu.memory_space<vmem>>, %arg7: memref<1x128xf32, #tpu.memory_space<vmem>>, %arg8: memref<128x128xbf16, #tpu.memory_space<vmem>>, %arg9: memref<1x128xf32, #tpu.memory_space<vmem>>, %arg10: memref<8x8xf32, #tpu.memory_space<vmem>>) attributes {dimension_semantics = [#tpu.dimension_semantics<parallel>], iteration_bounds = array<i64: 1>, scalar_prefetch = 0 : i64, scratch_operands = 0 : i64, tpu.core_type = #tpu.core_type<tc>, window_params = [{transform_indices = @transform_0, window_bounds = array<i64: 8, 16>}, {pipeline_mode = #tpu.pipeline_mode<synchronous>, transform_indices = @transform_1, window_bounds = array<i64: 16, 256>}, {pipeline_mode = #tpu.pipeline_mode<synchronous>, transform_indices = @transform_2, window_bounds = array<i64: 1, 256>}, {pipeline_mode = #tpu.pipeline_mode<synchronous>, transform_indices = @transform_3, window_bounds = array<i64: 256, 128>}, {pipeline_mode = #tpu.pipeline_mode<synchronous>, transform_indices = @transform_4, window_bounds = array<i64: 1, 128>}, {pipeline_mode = #tpu.pipeline_mode<synchronous>, transform_indices = @transform_5, window_bounds = array<i64: 128, 128>}, {pipeline_mode = #tpu.pipeline_mode<synchronous>, transform_indices = @transform_6, window_bounds = array<i64: 1, 128>}, {pipeline_mode = #tpu.pipeline_mode<synchronous>, transform_indices = @transform_7, window_bounds = array<i64: 128, 128>}, {pipeline_mode = #tpu.pipeline_mode<synchronous>, transform_indices = @transform_8, window_bounds = array<i64: 1, 128>}, {transform_indices = @transform_9, window_bounds = array<i64: 8, 8>}]} {
    %c0 = arith.constant 0 : index
    %c0_0 = arith.constant 0 : index
    %0 = vector.load %arg1[%c0, %c0_0] : memref<8x16xf32, #tpu.memory_space<vmem>>, vector<8x16xf32>
    %1 = arith.truncf %0 : vector<8x16xf32> to vector<8x16xbf16>
    %c0_1 = arith.constant 0 : index
    %c0_2 = arith.constant 0 : index
    %2 = vector.load %arg2[%c0_1, %c0_2] : memref<16x256xbf16, #tpu.memory_space<vmem>>, vector<16x256xbf16>
    %cst = arith.constant dense<0.000000e+00> : vector<8x256xf32>
    %3 = tpu.matmul %1, %2, %cst {dimension_numbers = #tpu.dot_dimension_numbers<[1], [0], [0], [1], [0, 0, 1, 1], [], []>} : vector<8x16xbf16>, vector<16x256xbf16>, vector<8x256xf32> -> vector<8x256xf32>
    %c0_3 = arith.constant 0 : index
    %c0_4 = arith.constant 0 : index
    %4 = vector.load %arg3[%c0_3, %c0_4] : memref<1x256xf32, #tpu.memory_space<vmem>>, vector<1x256xf32>
    %5 = vector.broadcast %4 : vector<1x256xf32> to vector<8x256xf32>
    %6 = arith.addf %3, %5 : vector<8x256xf32>
    %cst_5 = arith.constant 0.000000e+00 : f32
    %7 = vector.broadcast %cst_5 : f32 to vector<8x256xf32>
    %8 = arith.maximumf %6, %7 : vector<8x256xf32>
    %9 = arith.truncf %8 : vector<8x256xf32> to vector<8x256xbf16>
    %c0_6 = arith.constant 0 : index
    %c0_7 = arith.constant 0 : index
    %10 = vector.load %arg4[%c0_6, %c0_7] : memref<256x128xbf16, #tpu.memory_space<vmem>>, vector<256x128xbf16>
    %cst_8 = arith.constant dense<0.000000e+00> : vector<8x128xf32>
    %11 = tpu.matmul %9, %10, %cst_8 {dimension_numbers = #tpu.dot_dimension_numbers<[1], [0], [0], [1], [0, 0, 1, 1], [], []>} : vector<8x256xbf16>, vector<256x128xbf16>, vector<8x128xf32> -> vector<8x128xf32>
    %c0_9 = arith.constant 0 : index
    %c0_10 = arith.constant 0 : index
    %12 = vector.load %arg5[%c0_9, %c0_10] : memref<1x128xf32, #tpu.memory_space<vmem>>, vector<1x128xf32>
    %13 = vector.broadcast %12 : vector<1x128xf32> to vector<8x128xf32>
    %14 = arith.addf %11, %13 : vector<8x128xf32>
    %cst_11 = arith.constant 0.000000e+00 : f32
    %15 = vector.broadcast %cst_11 : f32 to vector<8x128xf32>
    %16 = arith.maximumf %14, %15 : vector<8x128xf32>
    %17 = arith.truncf %16 : vector<8x128xf32> to vector<8x128xbf16>
    %c0_12 = arith.constant 0 : index
    %c0_13 = arith.constant 0 : index
    %18 = vector.load %arg6[%c0_12, %c0_13] : memref<128x128xbf16, #tpu.memory_space<vmem>>, vector<128x128xbf16>
    %cst_14 = arith.constant dense<0.000000e+00> : vector<8x128xf32>
    %19 = tpu.matmul %17, %18, %cst_14 {dimension_numbers = #tpu.dot_dimension_numbers<[1], [0], [0], [1], [0, 0, 1, 1], [], []>} : vector<8x128xbf16>, vector<128x128xbf16>, vector<8x128xf32> -> vector<8x128xf32>
    %c0_15 = arith.constant 0 : index
    %c0_16 = arith.constant 0 : index
    %20 = vector.load %arg7[%c0_15, %c0_16] : memref<1x128xf32, #tpu.memory_space<vmem>>, vector<1x128xf32>
    %21 = vector.broadcast %20 : vector<1x128xf32> to vector<8x128xf32>
    %22 = arith.addf %19, %21 : vector<8x128xf32>
    %cst_17 = arith.constant 0.000000e+00 : f32
    %23 = vector.broadcast %cst_17 : f32 to vector<8x128xf32>
    %24 = arith.maximumf %22, %23 : vector<8x128xf32>
    %25 = arith.truncf %24 : vector<8x128xf32> to vector<8x128xbf16>
    %c0_18 = arith.constant 0 : index
    %c0_19 = arith.constant 0 : index
    %26 = vector.load %arg8[%c0_18, %c0_19] : memref<128x128xbf16, #tpu.memory_space<vmem>>, vector<128x128xbf16>
    %cst_20 = arith.constant dense<0.000000e+00> : vector<8x128xf32>
    %27 = tpu.matmul %25, %26, %cst_20 {dimension_numbers = #tpu.dot_dimension_numbers<[1], [0], [0], [1], [0, 0, 1, 1], [], []>} : vector<8x128xbf16>, vector<128x128xbf16>, vector<8x128xf32> -> vector<8x128xf32>
    %c0_21 = arith.constant 0 : index
    %c0_22 = arith.constant 0 : index
    %28 = vector.load %arg9[%c0_21, %c0_22] : memref<1x128xf32, #tpu.memory_space<vmem>>, vector<1x128xf32>
    %29 = vector.broadcast %28 : vector<1x128xf32> to vector<8x128xf32>
    %30 = arith.addf %27, %29 : vector<8x128xf32>
    %31 = math.tanh %30 : vector<8x128xf32>
    %cst_23 = arith.constant 2.000000e+00 : f32
    %32 = vector.broadcast %cst_23 : f32 to vector<8x128xf32>
    %33 = arith.mulf %31, %32 : vector<8x128xf32>
    %34 = vector.extract_strided_slice %33 {offsets = [0, 0], sizes = [8, 8], strides = [1, 1]} : vector<8x128xf32> to vector<8x8xf32>
    %c0_24 = arith.constant 0 : index
    %c0_25 = arith.constant 0 : index
    %35 = vector.load %arg10[%c0_24, %c0_25] : memref<8x8xf32, #tpu.memory_space<vmem>>, vector<8x8xf32>
    tpu.vector_store %arg10[%c0_24, %c0_25], %34 {strides = array<i32>} : memref<8x8xf32, #tpu.memory_space<vmem>>, vector<8x8xf32>,
    return
  }
  func.func @transform_0(%arg0: i32) -> (i32, i32) {
    %c0_i32 = arith.constant 0 : i32
    %c0_i32_0 = arith.constant 0 : i32
    return %arg0, %c0_i32 : i32, i32
  }
  func.func @transform_1(%arg0: i32) -> (i32, i32) {
    %c0_i32 = arith.constant 0 : i32
    %c0_i32_0 = arith.constant 0 : i32
    %c0_i32_1 = arith.constant 0 : i32
    return %c0_i32, %c0_i32_0 : i32, i32
  }
  func.func @transform_2(%arg0: i32) -> (i32, i32) {
    %c0_i32 = arith.constant 0 : i32
    %c0_i32_0 = arith.constant 0 : i32
    %c0_i32_1 = arith.constant 0 : i32
    return %c0_i32, %c0_i32_0 : i32, i32
  }
  func.func @transform_3(%arg0: i32) -> (i32, i32) {
    %c0_i32 = arith.constant 0 : i32
    %c0_i32_0 = arith.constant 0 : i32
    %c0_i32_1 = arith.constant 0 : i32
    return %c0_i32, %c0_i32_0 : i32, i32
  }
  func.func @transform_4(%arg0: i32) -> (i32, i32) {
    %c0_i32 = arith.constant 0 : i32
    %c0_i32_0 = arith.constant 0 : i32
    %c0_i32_1 = arith.constant 0 : i32
    return %c0_i32, %c0_i32_0 : i32, i32
  }
  func.func @transform_5(%arg0: i32) -> (i32, i32) {
    %c0_i32 = arith.constant 0 : i32
    %c0_i32_0 = arith.constant 0 : i32
    %c0_i32_1 = arith.constant 0 : i32
    return %c0_i32, %c0_i32_0 : i32, i32
  }
  func.func @transform_6(%arg0: i32) -> (i32, i32) {
    %c0_i32 = arith.constant 0 : i32
    %c0_i32_0 = arith.constant 0 : i32
    %c0_i32_1 = arith.constant 0 : i32
    return %c0_i32, %c0_i32_0 : i32, i32
  }
  func.func @transform_7(%arg0: i32) -> (i32, i32) {
    %c0_i32 = arith.constant 0 : i32
    %c0_i32_0 = arith.constant 0 : i32
    %c0_i32_1 = arith.constant 0 : i32
    return %c0_i32, %c0_i32_0 : i32, i32
  }
  func.func @transform_8(%arg0: i32) -> (i32, i32) {
    %c0_i32 = arith.constant 0 : i32
    %c0_i32_0 = arith.constant 0 : i32
    %c0_i32_1 = arith.constant 0 : i32
    return %c0_i32, %c0_i32_0 : i32, i32
  }
  func.func @transform_9(%arg0: i32) -> (i32, i32) {
    %c0_i32 = arith.constant 0 : i32
    %c0_i32_0 = arith.constant 0 : i32
    return %arg0, %c0_i32 : i32, i32
  }
}

</mosaic_0001>

<llo_original>
// kernel: tpu_custom_call.1
$region0: #{tpu_custom_call.1}
  #allocation0 [shape = 'u32[]', space=smem, size = 0x4, offset = 0x4, fixed_abs, tag = 'smem constant byte address 0x4 - core index']
  #allocation1 [shape = 'u32[144,128]{1,0:T(1,128)}', space=vmem, size = 0x12000, scoped, tag = 'internal scratch']
  %s0 = inlined_call_operand.hbm [shape: f32[2,16], index: 0, kind: input, shape index: {}]
  %s1 = inlined_call_operand.hbm [shape: bf16[16,256], index: 1, kind: input, shape index: {}]
  %s2 = inlined_call_operand.vmem [shape: f32[1,256], index: 2, kind: input, shape index: {}]
  %s3 = inlined_call_operand.hbm [shape: bf16[256,128], index: 3, kind: input, shape index: {}]
  %s4 = inlined_call_operand.vmem [shape: f32[1,128], index: 4, kind: input, shape index: {}]
  %s5 = inlined_call_operand.hbm [shape: bf16[128,128], index: 5, kind: input, shape index: {}]
  %s6 = inlined_call_operand.vmem [shape: f32[1,128], index: 6, kind: input, shape index: {}]
  %s7 = inlined_call_operand.hbm [shape: bf16[128,128], index: 7, kind: input, shape index: {}]
  %s8 = inlined_call_operand.vmem [shape: f32[1,128], index: 8, kind: input, shape index: {}]
  %s9 = inlined_call_operand.hbm [shape: f32[2,8], index: 9, kind: output, shape index: {}]
  %s10 = sld [smem:[#allocation0]]
  $region66: #{tpu_custom_call.1} parent=0
    _
  %s12 = ssub.s32 1, %s10
  %s13 = scalar_select 0, %s12, %s10
  $region1: #{tpu_custom_call.1} parent=0
    #allocation2 [shape = 'u8[4096]{0}', space=vmem, size = 0x1000, scoped, tag = 'input window, operand 0, single buffered']
    #allocation3 [shape = 's32[1]{0}', space=sflag, size = 0x4, scoped, tag = 'scoped memory for tpu_custom_call.1']
    #allocation4 [shape = 's32[1]{0}', space=sflag, size = 0x4, scoped, tag = 'scoped memory for tpu_custom_call.1']
    #allocation5 [shape = 'u8[8192]{0}', space=vmem, size = 0x2000, scoped, tag = 'input window, operand 1, single buffered']
    #allocation6 [shape = 's32[1]{0}', space=sflag, size = 0x4, scoped, tag = 'scoped memory for tpu_custom_call.1']
    #allocation7 [shape = 'u8[65536]{0}', space=vmem, size = 0x10000, scoped, tag = 'input window, operand 3, single buffered']
    #allocation8 [shape = 'u8[32768]{0}', space=vmem, size = 0x8000, scoped, tag = 'input window, operand 5, single buffered']
    #allocation9 [shape = 's32[1]{0}', space=sflag, size = 0x4, scoped, tag = 'scoped memory for tpu_custom_call.1']
    #allocation10 [shape = 'u8[32768]{0}', space=vmem, size = 0x8000, scoped, tag = 'input window, operand 7, single buffered']
    #allocation11 [shape = 'u8[4096]{0}', space=vmem, size = 0x1000, scoped, tag = 'output window, operand 0, single buffered']
    %14 = vsyncpa [#allocation3], 0
    %15 = vsyncpa [#allocation6], 0
    %16 = vsyncpa [#allocation9], 0
    %17 = vsyncpa [#allocation4], 0
    // Predicated region
    $region2: #{tpu_custom_call.1} parent=1 // pred_check
      _
    $region3: #{tpu_custom_call.1} parent=1 // pred_check_branch
      %19 = sbr.rel (0) target = $region5
    $region4: #{tpu_custom_call.1} parent=1 // pred_region
      %s21 = ssub.s32 128, 32
      %22 = vsyncadd [#allocation3], %s21
      %s23 = sshll.u32 [#allocation2], 4
      %s24 = int_to_ptr.vmem [resolvable:$true] %s23
      %29 = dma.hbm_to_vmem [thread:$0]  %s0, 32, %s24, [#allocation3], 32, 32, 2
    $region5: #{tpu_custom_call.1} parent=1 // pred_fallthru
      _
    // Predicated region
    $region6: #{tpu_custom_call.1} parent=1 // pred_check
      _
    $region7: #{tpu_custom_call.1} parent=1 // pred_check_branch
      %31 = sbr.rel (0) target = $region9
    $region8: #{tpu_custom_call.1} parent=1 // pred_region
      %s33 = ssub.s32 256, 256
      %34 = vsyncadd [#allocation6], %s33
      %s35 = sshll.u32 [#allocation5], 4
      %s36 = int_to_ptr.vmem [resolvable:$true] %s35
      %41 = dma.hbm_to_vmem [thread:$0]  %s1, 256, %s36, [#allocation6], 128, 128, 8
    $region9: #{tpu_custom_call.1} parent=1 // pred_fallthru
      _
    // Predicated region
    $region10: #{tpu_custom_call.1} parent=1 // pred_check
      _
    $region11: #{tpu_custom_call.1} parent=1 // pred_check_branch
      %43 = sbr.rel (0) target = $region13
    $region12: #{tpu_custom_call.1} parent=1 // pred_region
      _
    $region13: #{tpu_custom_call.1} parent=1 // pred_fallthru
      _
    // Predicated region
    $region14: #{tpu_custom_call.1} parent=1 // pred_check
      _
    $region15: #{tpu_custom_call.1} parent=1 // pred_check_branch
      %45 = sbr.rel (0) target = $region17
    $region16: #{tpu_custom_call.1} parent=1 // pred_region
      %s47 = ssub.s32 2048, 2048
      %48 = vsyncadd [#allocation6], %s47
      %s49 = sshll.u32 [#allocation7], 4
      %s50 = int_to_ptr.vmem [resolvable:$true] %s49
      %55 = dma.hbm_to_vmem [thread:$0]  %s3, 2048, %s50, [#allocation6], 64, 64, 4
    $region17: #{tpu_custom_call.1} parent=1 // pred_fallthru
      _
    // Predicated region
    $region18: #{tpu_custom_call.1} parent=1 // pred_check
      _
    $region19: #{tpu_custom_call.1} parent=1 // pred_check_branch
      %57 = sbr.rel (0) target = $region21
    $region20: #{tpu_custom_call.1} parent=1 // pred_region
      _
    $region21: #{tpu_custom_call.1} parent=1 // pred_fallthru
      _
    // Predicated region
    $region22: #{tpu_custom_call.1} parent=1 // pred_check
      _
    $region23: #{tpu_custom_call.1} parent=1 // pred_check_branch
      %59 = sbr.rel (0) target = $region25
    $region24: #{tpu_custom_call.1} parent=1 // pred_region
      %s61 = ssub.s32 1024, 1024
      %62 = vsyncadd [#allocation9], %s61
      %s63 = sshll.u32 [#allocation8], 4
      %s64 = int_to_ptr.vmem [resolvable:$true] %s63
      %69 = dma.hbm_to_vmem [thread:$0]  %s5, 1024, %s64, [#allocation9], 64, 64, 4
    $region25: #{tpu_custom_call.1} parent=1 // pred_fallthru
      _
    // Predicated region
    $region26: #{tpu_custom_call.1} parent=1 // pred_check
      _
    $region27: #{tpu_custom_call.1} parent=1 // pred_check_branch
      %71 = sbr.rel (0) target = $region29
    $region28: #{tpu_custom_call.1} parent=1 // pred_region
      _
    $region29: #{tpu_custom_call.1} parent=1 // pred_fallthru
      _
    // Predicated region
    $region30: #{tpu_custom_call.1} parent=1 // pred_check
      _
    $region31: #{tpu_custom_call.1} parent=1 // pred_check_branch
      %73 = sbr.rel (0) target = $region33
    $region32: #{tpu_custom_call.1} parent=1 // pred_region
      %s75 = ssub.s32 1024, 1024
      %76 = vsyncadd [#allocation9], %s75
      %s77 = sshll.u32 [#allocation10], 4
      %s78 = int_to_ptr.vmem [resolvable:$true] %s77
      %83 = dma.hbm_to_vmem [thread:$0]  %s7, 1024, %s78, [#allocation9], 64, 64, 4
    $region33: #{tpu_custom_call.1} parent=1 // pred_fallthru
      _
    // Predicated region
    $region34: #{tpu_custom_call.1} parent=1 // pred_check
      _
    $region35: #{tpu_custom_call.1} parent=1 // pred_check_branch
      %85 = sbr.rel (0) target = $region37
    $region36: #{tpu_custom_call.1} parent=1 // pred_region
      _
    $region37: #{tpu_custom_call.1} parent=1 // pred_fallthru
      _
    // Predicated region
    $region38: #{tpu_custom_call.1} parent=1 // pred_check
      _
    $region39: #{tpu_custom_call.1} parent=1 // pred_check_branch
      %87 = sbr.rel (0) target = $region41
    $region40: #{tpu_custom_call.1} parent=1 // pred_region
      %88 = dma.done [#allocation3], 128
    $region41: #{tpu_custom_call.1} parent=1 // pred_fallthru
      _
    // Predicated region
    $region42: #{tpu_custom_call.1} parent=1 // pred_check
      _
    $region43: #{tpu_custom_call.1} parent=1 // pred_check_branch
      %90 = sbr.rel (0) target = $region45
    $region44: #{tpu_custom_call.1} parent=1 // pred_region
      %91 = dma.done [#allocation6], 256
    $region45: #{tpu_custom_call.1} parent=1 // pred_fallthru
      _
    // Predicated region
    $region46: #{tpu_custom_call.1} parent=1 // pred_check
      _
    $region47: #{tpu_custom_call.1} parent=1 // pred_check_branch
      %93 = sbr.rel (0) target = $region49
    $region48: #{tpu_custom_call.1} parent=1 // pred_region
      %94 = dma.done [#allocation6], 2048
    $region49: #{tpu_custom_call.1} parent=1 // pred_fallthru
      _
    // Predicated region
    $region50: #{tpu_custom_call.1} parent=1 // pred_check
      _
    $region51: #{tpu_custom_call.1} parent=1 // pred_check_branch
      %96 = sbr.rel (0) target = $region53
    $region52: #{tpu_custom_call.1} parent=1 // pred_region
      %97 = dma.done [#allocation9], 1024
    $region53: #{tpu_custom_call.1} parent=1 // pred_fallthru
      _
    // Predicated region
    $region54: #{tpu_custom_call.1} parent=1 // pred_check
      _
    $region55: #{tpu_custom_call.1} parent=1 // pred_check_branch
      %99 = sbr.rel (0) target = $region57
    $region56: #{tpu_custom_call.1} parent=1 // pred_region
      %100 = dma.done [#allocation9], 1024
    $region57: #{tpu_custom_call.1} parent=1 // pred_fallthru
      _
    %v102 = vld [vmem:[#allocation2] sm:$0xff]
    %v103 = vpack.c.bf16 %v102, %v102
    %v104 = vld [vmem:[#allocation5] sm:$0xff]
    %v105 = vld [vmem:[#allocation5 + $0x8] sm:$0xff]
    %v106 = vld [vmem:[%s2] sm:$0x3]
    %v108 = vlaneseq
    %v109 = vshrl.u32 %v108, 7
    %v110 = vsub.s32 0, %v109
    %v111 = vrot.slane %v106, %v110
    %v112 = vlaneseq
    %v113 = vshrl.u32 %v112, 7
    %v114 = vsub.s32 1, %v113
    %v115 = vrot.slane %v106, %v114
    %v120 = vunpack.c.l.b16 %v104
    %v121 = vunpack.c.h.b16 %v104
    %v122 = vunpack.c.l.b16 %v105
    %v123 = vunpack.c.h.b16 %v105
    %v124 = vpack.c.b16 %v122, %v120
    %v125 = vpack.c.b16 %v123, %v121
    %vm128 = vcmask 130048
    %v130 = vsel %vm128, %v103, 0
    %132 = vmatprep.subr.bf16.mxu0 %v125
    %133 = vmatpush1.bf16.msra.mxu0 %v124
    %134 = vmatprep.subr.bf16.mxu0 0
    %135 = vmatpush1.bf16.msra.mxu0 0
    %136 = vmatprep.subr.bf16.mxu0 0
    %137 = vmatpush1.bf16.msra.mxu0 0
    %138 = vmatprep.subr.bf16.mxu0 0
    %139 = vmatpush1.bf16.msra.mxu0 0
    %140 = vmatprep.subr.bf16.mxu0 0
    %141 = vmatpush1.bf16.msra.mxu0 0
    %142 = vmatprep.subr.bf16.mxu0 0
    %143 = vmatpush1.bf16.msra.mxu0 0
    %144 = vmatprep.subr.bf16.mxu0 0
    %145 = vmatpush1.bf16.msra.mxu0 0
    %146 = vmatprep.subr.bf16.mxu0 0
    %147 = vmatpush1.bf16.msra.mxu0 0
    %148 = vmatprep.subr.bf16.mxu0 0
    %149 = vmatpush1.bf16.msra.mxu0 0
    %150 = vmatprep.subr.bf16.mxu0 0
    %151 = vmatpush1.bf16.msra.mxu0 0
    %152 = vmatprep.subr.bf16.mxu0 0
    %153 = vmatpush1.bf16.msra.mxu0 0
    %154 = vmatprep.subr.bf16.mxu0 0
    %155 = vmatpush1.bf16.msra.mxu0 0
    %156 = vmatprep.subr.bf16.mxu0 0
    %157 = vmatpush1.bf16.msra.mxu0 0
    %158 = vmatprep.subr.bf16.mxu0 0
    %159 = vmatpush1.bf16.msra.mxu0 0
    %160 = vmatprep.subr.bf16.mxu0 0
    %161 = vmatpush1.bf16.msra.mxu0 0
    %162 = vmatprep.subr.bf16.mxu0 0
    %163 = vmatpush1.bf16.msra.mxu0 0
    %164 = vmatprep.mubr.bf16.mxu0 0
    %165 = vmatmul.mubr.bf16.gmra.mrb[0].mxu0 %v130
    %v166 = vpop.f32.mrb[0].mxu0
    %v167 = vadd.f32 %v111, %v166
    %v168 = vpop.f32.mrb[0].mxu0
    %v169 = vadd.f32 %v115, %v168
    %v170 = vpop.f32.mrb[0].mxu0
    %v171 = vpop.f32.mrb[0].mxu0
    %172 = vdwg.mxu0
    %v173 = vmax.f32 %v167, 0.0
    %v174 = vmax.f32 %v169, 0.0
    %v175 = vpack.c.bf16 %v173, %v173
    %v176 = vpack.c.bf16 %v174, %v174
    %v177 = vld [vmem:[#allocation7] sm:$0xf]
    %v178 = vld [vmem:[#allocation7 + $0x4] sm:$0xf]
    %v179 = vld [vmem:[#allocation7 + $0x8] sm:$0xf]
    %v180 = vld [vmem:[#allocation7 + $0xc] sm:$0xf]
    %v181 = vld [vmem:[#allocation7 + $0x10] sm:$0xf]
    %v182 = vld [vmem:[#allocation7 + $0x14] sm:$0xf]
    %v183 = vld [vmem:[#allocation7 + $0x18] sm:$0xf]
    %v184 = vld [vmem:[#allocation7 + $0x1c] sm:$0xf]
    %v185 = vld [vmem:[#allocation7 + $0x20] sm:$0xf]
    %v186 = vld [vmem:[#allocation7 + $0x24] sm:$0xf]
    %v187 = vld [vmem:[#allocation7 + $0x28] sm:$0xf]
    %v188 = vld [vmem:[#allocation7 + $0x2c] sm:$0xf]
    %v189 = vld [vmem:[#allocation7 + $0x30] sm:$0xf]
    %v190 = vld [vmem:[#allocation7 + $0x34] sm:$0xf]
    %v191 = vld [vmem:[#allocation7 + $0x38] sm:$0xf]
    %v192 = vld [vmem:[#allocation7 + $0x3c] sm:$0xf]
    %v193 = vld [vmem:[#allocation7 + $0x40] sm:$0xf]
    %v194 = vld [vmem:[#allocation7 + $0x44] sm:$0xf]
    %v195 = vld [vmem:[#allocation7 + $0x48] sm:$0xf]
    %v196 = vld [vmem:[#allocation7 + $0x4c] sm:$0xf]
    %v197 = vld [vmem:[#allocation7 + $0x50] sm:$0xf]
    %v198 = vld [vmem:[#allocation7 + $0x54] sm:$0xf]
    %v199 = vld [vmem:[#allocation7 + $0x58] sm:$0xf]
    %v200 = vld [vmem:[#allocation7 + $0x5c] sm:$0xf]
    %v201 = vld [vmem:[#allocation7 + $0x60] sm:$0xf]
    %v202 = vld [vmem:[#allocation7 + $0x64] sm:$0xf]
    %v203 = vld [vmem:[#allocation7 + $0x68] sm:$0xf]
    %v204 = vld [vmem:[#allocation7 + $0x6c] sm:$0xf]
    %v205 = vld [vmem:[#allocation7 + $0x70] sm:$0xf]
    %v206 = vld [vmem:[#allocation7 + $0x74] sm:$0xf]
    %v207 = vld [vmem:[#allocation7 + $0x78] sm:$0xf]
    %v208 = vld [vmem:[#allocation7 + $0x7c] sm:$0xf]
    %v209 = vld [vmem:[%s4] sm:$0x1]
    %v211 = vlaneseq
    %v212 = vshrl.u32 %v211, 7
    %v213 = vsub.s32 0, %v212
    %v214 = vrot.slane %v209, %v213
    %v248 = vunpack.c.l.b16 %v177
    %v249 = vunpack.c.l.b16 %v178
    %v250 = vunpack.c.l.b16 %v179
    %v251 = vunpack.c.l.b16 %v180
    %v252 = vunpack.c.l.b16 %v181
    %v253 = vunpack.c.l.b16 %v182
    %v254 = vunpack.c.l.b16 %v183
    %v255 = vunpack.c.l.b16 %v184
    %v256 = vunpack.c.l.b16 %v185
    %v257 = vunpack.c.l.b16 %v186
    %v258 = vunpack.c.l.b16 %v187
    %v259 = vunpack.c.l.b16 %v188
    %v260 = vunpack.c.l.b16 %v189
    %v261 = vunpack.c.l.b16 %v190
    %v262 = vunpack.c.l.b16 %v191
    %v263 = vunpack.c.l.b16 %v192
    %v264 = vunpack.c.l.b16 %v193
    %v265 = vunpack.c.l.b16 %v194
    %v266 = vunpack.c.l.b16 %v195
    %v267 = vunpack.c.l.b16 %v196
    %v268 = vunpack.c.l.b16 %v197
    %v269 = vunpack.c.l.b16 %v198
    %v270 = vunpack.c.l.b16 %v199
    %v271 = vunpack.c.l.b16 %v200
    %v272 = vunpack.c.l.b16 %v201
    %v273 = vunpack.c.l.b16 %v202
    %v274 = vunpack.c.l.b16 %v203
    %v275 = vunpack.c.l.b16 %v204
    %v276 = vunpack.c.l.b16 %v205
    %v277 = vunpack.c.l.b16 %v206
    %v278 = vunpack.c.l.b16 %v207
    %v279 = vunpack.c.l.b16 %v208
    %v280 = vpack.c.b16 %v249, %v248
    %v281 = vpack.c.b16 %v251, %v250
    %v282 = vpack.c.b16 %v253, %v252
    %v283 = vpack.c.b16 %v255, %v254
    %v284 = vpack.c.b16 %v257, %v256
    %v285 = vpack.c.b16 %v259, %v258
    %v286 = vpack.c.b16 %v261, %v260
    %v287 = vpack.c.b16 %v263, %v262
    %v288 = vpack.c.b16 %v265, %v264
    %v289 = vpack.c.b16 %v267, %v266
    %v290 = vpack.c.b16 %v269, %v268
    %v291 = vpack.c.b16 %v271, %v270
    %v292 = vpack.c.b16 %v273, %v272
    %v293 = vpack.c.b16 %v275, %v274
    %v294 = vpack.c.b16 %v277, %v276
    %v295 = vpack.c.b16 %v279, %v278
    %312 = vmatprep.subr.bf16.mxu0 0
    %313 = vmatpush1.bf16.msra.mxu0 %v280
    %314 = vmatprep.subr.bf16.mxu0 0
    %315 = vmatpush1.bf16.msra.mxu0 %v281
    %316 = vmatprep.subr.bf16.mxu0 0
    %317 = vmatpush1.bf16.msra.mxu0 %v282
    %318 = vmatprep.subr.bf16.mxu0 0
    %319 = vmatpush1.bf16.msra.mxu0 %v283
    %320 = vmatprep.subr.bf16.mxu0 0
    %321 = vmatpush1.bf16.msra.mxu0 %v284
    %322 = vmatprep.subr.bf16.mxu0 0
    %323 = vmatpush1.bf16.msra.mxu0 %v285
    %324 = vmatprep.subr.bf16.mxu0 0
    %325 = vmatpush1.bf16.msra.mxu0 %v286
    %326 = vmatprep.subr.bf16.mxu0 0
    %327 = vmatpush1.bf16.msra.mxu0 %v287
    %328 = vmatprep.subr.bf16.mxu0 0
    %329 = vmatpush1.bf16.msra.mxu0 %v288
    %330 = vmatprep.subr.bf16.mxu0 0
    %331 = vmatpush1.bf16.msra.mxu0 %v289
    %332 = vmatprep.subr.bf16.mxu0 0
    %333 = vmatpush1.bf16.msra.mxu0 %v290
    %334 = vmatprep.subr.bf16.mxu0 0
    %335 = vmatpush1.bf16.msra.mxu0 %v291
    %336 = vmatprep.subr.bf16.mxu0 0
    %337 = vmatpush1.bf16.msra.mxu0 %v292
    %338 = vmatprep.subr.bf16.mxu0 0
    %339 = vmatpush1.bf16.msra.mxu0 %v293
    %340 = vmatprep.subr.bf16.mxu0 0
    %341 = vmatpush1.bf16.msra.mxu0 %v294
    %342 = vmatprep.subr.bf16.mxu0 0
    %343 = vmatpush1.bf16.msra.mxu0 %v295
    %344 = vmatprep.mubr.bf16.mxu0 %v176
    %345 = vmatmul.mubr.bf16.gmra.mrb[0].mxu0 %v175
    %v346 = vpop.f32.mrb[0].mxu0
    %v347 = vadd.f32 %v214, %v346
    %v348 = vpop.f32.mrb[0].mxu0
    %v349 = vpop.f32.mrb[0].mxu0
    %v350 = vpop.f32.mrb[0].mxu0
    %351 = vdwg.mxu0
    %v352 = vmax.f32 %v347, 0.0
    %v353 = vpack.c.bf16 %v352, %v352
    %v354 = vld [vmem:[#allocation8] sm:$0xf]
    %v355 = vld [vmem:[#allocation8 + $0x4] sm:$0xf]
    %v356 = vld [vmem:[#allocation8 + $0x8] sm:$0xf]
    %v357 = vld [vmem:[#allocation8 + $0xc] sm:$0xf]
    %v358 = vld [vmem:[#allocation8 + $0x10] sm:$0xf]
    %v359 = vld [vmem:[#allocation8 + $0x14] sm:$0xf]
    %v360 = vld [vmem:[#allocation8 + $0x18] sm:$0xf]
    %v361 = vld [vmem:[#allocation8 + $0x1c] sm:$0xf]
    %v362 = vld [vmem:[#allocation8 + $0x20] sm:$0xf]
    %v363 = vld [vmem:[#allocation8 + $0x24] sm:$0xf]
    %v364 = vld [vmem:[#allocation8 + $0x28] sm:$0xf]
    %v365 = vld [vmem:[#allocation8 + $0x2c] sm:$0xf]
    %v366 = vld [vmem:[#allocation8 + $0x30] sm:$0xf]
    %v367 = vld [vmem:[#allocation8 + $0x34] sm:$0xf]
    %v368 = vld [vmem:[#allocation8 + $0x38] sm:$0xf]
    %v369 = vld [vmem:[#allocation8 + $0x3c] sm:$0xf]
    %v370 = vld [vmem:[%s6] sm:$0x1]
    %v372 = vlaneseq
    %v373 = vshrl.u32 %v372, 7
    %v374 = vsub.s32 0, %v373
    %v375 = vrot.slane %v370, %v374
    %v393 = vunpack.c.l.b16 %v354
    %v394 = vunpack.c.l.b16 %v355
    %v395 = vunpack.c.l.b16 %v356
    %v396 = vunpack.c.l.b16 %v357
    %v397 = vunpack.c.l.b16 %v358
    %v398 = vunpack.c.l.b16 %v359
    %v399 = vunpack.c.l.b16 %v360
    %v400 = vunpack.c.l.b16 %v361
    %v401 = vunpack.c.l.b16 %v362
    %v402 = vunpack.c.l.b16 %v363
    %v403 = vunpack.c.l.b16 %v364
    %v404 = vunpack.c.l.b16 %v365
    %v405 = vunpack.c.l.b16 %v366
    %v406 = vunpack.c.l.b16 %v367
    %v407 = vunpack.c.l.b16 %v368
    %v408 = vunpack.c.l.b16 %v369
    %v409 = vpack.c.b16 %v394, %v393
    %v410 = vpack.c.b16 %v396, %v395
    %v411 = vpack.c.b16 %v398, %v397
    %v412 = vpack.c.b16 %v400, %v399
    %v413 = vpack.c.b16 %v402, %v401
    %v414 = vpack.c.b16 %v404, %v403
    %v415 = vpack.c.b16 %v406, %v405
    %v416 = vpack.c.b16 %v408, %v407
    %425 = vmatprep.subr.bf16.mxu0 0
    %426 = vmatpush1.bf16.msra.mxu0 %v409
    %427 = vmatprep.subr.bf16.mxu0 0
    %428 = vmatpush1.bf16.msra.mxu0 %v410
    %429 = vmatprep.subr.bf16.mxu0 0
    %430 = vmatpush1.bf16.msra.mxu0 %v411
    %431 = vmatprep.subr.bf16.mxu0 0
    %432 = vmatpush1.bf16.msra.mxu0 %v412
    %433 = vmatprep.subr.bf16.mxu0 0
    %434 = vmatpush1.bf16.msra.mxu0 %v413
    %435 = vmatprep.subr.bf16.mxu0 0
    %436 = vmatpush1.bf16.msra.mxu0 %v414
    %437 = vmatprep.subr.bf16.mxu0 0
    %438 = vmatpush1.bf16.msra.mxu0 %v415
    %439 = vmatprep.subr.bf16.mxu0 0
    %440 = vmatpush1.bf16.msra.mxu0 %v416
    %441 = vmatprep.subr.bf16.mxu0 0
    %442 = vmatpush1.bf16.msra.mxu0 0
    %443 = vmatprep.subr.bf16.mxu0 0
    %444 = vmatpush1.bf16.msra.mxu0 0
    %445 = vmatprep.subr.bf16.mxu0 0
    %446 = vmatpush1.bf16.msra.mxu0 0
    %447 = vmatprep.subr.bf16.mxu0 0
    %448 = vmatpush1.bf16.msra.mxu0 0
    %449 = vmatprep.subr.bf16.mxu0 0
    %450 = vmatpush1.bf16.msra.mxu0 0
    %451 = vmatprep.subr.bf16.mxu0 0
    %452 = vmatpush1.bf16.msra.mxu0 0
    %453 = vmatprep.subr.bf16.mxu0 0
    %454 = vmatpush1.bf16.msra.mxu0 0
    %455 = vmatprep.subr.bf16.mxu0 0
    %456 = vmatpush1.bf16.msra.mxu0 0
    %457 = vmatprep.mubr.bf16.mxu0 0
    %458 = vmatmul.mubr.bf16.gmra.mrb[0].mxu0 %v353
    %v459 = vpop.f32.mrb[0].mxu0
    %v460 = vadd.f32 %v375, %v459
    %v461 = vpop.f32.mrb[0].mxu0
    %v462 = vpop.f32.mrb[0].mxu0
    %v463 = vpop.f32.mrb[0].mxu0
    %464 = vdwg.mxu0
    %v465 = vmax.f32 %v460, 0.0
    %v466 = vpack.c.bf16 %v465, %v465
    %v467 = vld [vmem:[#allocation10] sm:$0xf]
    %v468 = vld [vmem:[#allocation10 + $0x4] sm:$0xf]
    %v469 = vld [vmem:[#allocation10 + $0x8] sm:$0xf]
    %v470 = vld [vmem:[#allocation10 + $0xc] sm:$0xf]
    %v471 = vld [vmem:[#allocation10 + $0x10] sm:$0xf]
    %v472 = vld [vmem:[#allocation10 + $0x14] sm:$0xf]
    %v473 = vld [vmem:[#allocation10 + $0x18] sm:$0xf]
    %v474 = vld [vmem:[#allocation10 + $0x1c] sm:$0xf]
    %v475 = vld [vmem:[#allocation10 + $0x20] sm:$0xf]
    %v476 = vld [vmem:[#allocation10 + $0x24] sm:$0xf]
    %v477 = vld [vmem:[#allocation10 + $0x28] sm:$0xf]
    %v478 = vld [vmem:[#allocation10 + $0x2c] sm:$0xf]
    %v479 = vld [vmem:[#allocation10 + $0x30] sm:$0xf]
    %v480 = vld [vmem:[#allocation10 + $0x34] sm:$0xf]
    %v481 = vld [vmem:[#allocation10 + $0x38] sm:$0xf]
    %v482 = vld [vmem:[#allocation10 + $0x3c] sm:$0xf]
    %v483 = vld [vmem:[%s8] sm:$0x1]
    %v485 = vlaneseq
    %v486 = vshrl.u32 %v485, 7
    %v487 = vsub.s32 0, %v486
    %v488 = vrot.slane %v483, %v487
    %v506 = vunpack.c.l.b16 %v467
    %v507 = vunpack.c.l.b16 %v468
    %v508 = vunpack.c.l.b16 %v469
    %v509 = vunpack.c.l.b16 %v470
    %v510 = vunpack.c.l.b16 %v471
    %v511 = vunpack.c.l.b16 %v472
    %v512 = vunpack.c.l.b16 %v473
    %v513 = vunpack.c.l.b16 %v474
    %v514 = vunpack.c.l.b16 %v475
    %v515 = vunpack.c.l.b16 %v476
    %v516 = vunpack.c.l.b16 %v477
    %v517 = vunpack.c.l.b16 %v478
    %v518 = vunpack.c.l.b16 %v479
    %v519 = vunpack.c.l.b16 %v480
    %v520 = vunpack.c.l.b16 %v481
    %v521 = vunpack.c.l.b16 %v482
    %v522 = vpack.c.b16 %v507, %v506
    %v523 = vpack.c.b16 %v509, %v508
    %v524 = vpack.c.b16 %v511, %v510
    %v525 = vpack.c.b16 %v513, %v512
    %v526 = vpack.c.b16 %v515, %v514
    %v527 = vpack.c.b16 %v517, %v516
    %v528 = vpack.c.b16 %v519, %v518
    %v529 = vpack.c.b16 %v521, %v520
    %538 = vmatprep.subr.bf16.mxu0 0
    %539 = vmatpush1.bf16.msra.mxu0 %v522
    %540 = vmatprep.subr.bf16.mxu0 0
    %541 = vmatpush1.bf16.msra.mxu0 %v523
    %542 = vmatprep.subr.bf16.mxu0 0
    %543 = vmatpush1.bf16.msra.mxu0 %v524
    %544 = vmatprep.subr.bf16.mxu0 0
    %545 = vmatpush1.bf16.msra.mxu0 %v525
    %546 = vmatprep.subr.bf16.mxu0 0
    %547 = vmatpush1.bf16.msra.mxu0 %v526
    %548 = vmatprep.subr.bf16.mxu0 0
    %549 = vmatpush1.bf16.msra.mxu0 %v527
    %550 = vmatprep.subr.bf16.mxu0 0
    %551 = vmatpush1.bf16.msra.mxu0 %v528
    %552 = vmatprep.subr.bf16.mxu0 0
    %553 = vmatpush1.bf16.msra.mxu0 %v529
    %554 = vmatprep.subr.bf16.mxu0 0
    %555 = vmatpush1.bf16.msra.mxu0 0
    %556 = vmatprep.subr.bf16.mxu0 0
    %557 = vmatpush1.bf16.msra.mxu0 0
    %558 = vmatprep.subr.bf16.mxu0 0
    %559 = vmatpush1.bf16.msra.mxu0 0
    %560 = vmatprep.subr.bf16.mxu0 0
    %561 = vmatpush1.bf16.msra.mxu0 0
    %562 = vmatprep.subr.bf16.mxu0 0
    %563 = vmatpush1.bf16.msra.mxu0 0
    %564 = vmatprep.subr.bf16.mxu0 0
    %565 = vmatpush1.bf16.msra.mxu0 0
    %566 = vmatprep.subr.bf16.mxu0 0
    %567 = vmatpush1.bf16.msra.mxu0 0
    %568 = vmatprep.subr.bf16.mxu0 0
    %569 = vmatpush1.bf16.msra.mxu0 0
    %570 = vmatprep.mubr.bf16.mxu0 0
    %571 = vmatmul.mubr.bf16.gmra.mrb[0].mxu0 %v466
    %v572 = vpop.f32.mrb[0].mxu0
    %v573 = vadd.f32 %v488, %v572
    %v574 = vpop.f32.mrb[0].mxu0
    %v575 = vpop.f32.mrb[0].mxu0
    %v576 = vpop.f32.mrb[0].mxu0
    %577 = vdwg.mxu0
    %v578 = vtanh.pop %v573
    %v579 = vmul.f32 %v578, 2.0
    %vm580 = vcmask 64512
    %581 = vst.msk [vmem:[#allocation11] sm:$0xff] %vm580, %v579
    // Predicated region
    $region58: #{tpu_custom_call.1} parent=1 // pred_check
      _
    $region59: #{tpu_custom_call.1} parent=1 // pred_check_branch
      %583 = sbr.rel (0) target = $region61
    $region60: #{tpu_custom_call.1} parent=1 // pred_region
      %s585 = ssub.s32 128, 32
      %586 = vsyncadd [#allocation4], %s585
      %s587 = sshll.u32 [#allocation11], 4
      %s588 = int_to_ptr.vmem [resolvable:$true] %s587
      %593 = dma.vmem_to_hbm [thread:$0]  %s588, 32, %s9, [#allocation4], 32, 32, 2
    $region61: #{tpu_custom_call.1} parent=1 // pred_fallthru
      _
    // Predicated region
    $region62: #{tpu_custom_call.1} parent=1 // pred_check
      _
    $region63: #{tpu_custom_call.1} parent=1 // pred_check_branch
      %595 = sbr.rel (0) target = $region65
    $region64: #{tpu_custom_call.1} parent=1 // pred_region
      %596 = dma.done [#allocation4], 128
    $region65: #{tpu_custom_call.1} parent=1 // pred_fallthru
      _
    %597 = vsyncpa [#allocation3], 1
    %598 = vsyncpa [#allocation6], 1
    %599 = vsyncpa [#allocation9], 1
    %600 = vsyncpa [#allocation4], 1

</llo_original>
